<compile_context>
chip_gen: v5e
topology: v5e:2x2
jax: 0.10.0
libtpu: 0.0.40
codegen_flags: <defaults>
</compile_context>

<pallas_src>
import functools

import jax
import jax.numpy as jnp
from jax.experimental import pallas as pl
from jax.experimental.pallas import tpu as pltpu


def _skip_dma_copy_kernel(x_ref, o_ref, sem, *, chunks):
    """HBM->HBM DMA copy of the whole array.

    `chunks` is a static tuple of (start, size) along the leading axis, or
    None for a single whole-array copy.  All copies are started first, then
    waited on, so multiple DMA engines can overlap on large inputs.
    """
    if chunks is None:
        cp = pltpu.make_async_copy(x_ref, o_ref, sem.at[0])
        cp.start()
        cp.wait()
        return

    copies = []
    for c, (start, size) in enumerate(chunks):
        cp = pltpu.make_async_copy(
            x_ref.at[pl.ds(start, size)],
            o_ref.at[pl.ds(start, size)],
            sem.at[c],
        )
        cp.start()
        copies.append(cp)
    for cp in copies:
        cp.wait()


# Below this size a single DMA is issued (chunking only adds descriptor
# overhead for tiny tensors).
_SMALL_BYTES = 512 * 1024
_MAX_CHUNKS = 4


def skip_forward(x: jax.Array, *, use_kernel: bool = False) -> jax.Array:
    """Forward pass of the PyTorch `Skip` module (identity).

    Default: return the input unchanged (no kernel, no HBM round trip — the
    optimal realization of an identity op).
    use_kernel=True materializes the identity as a fresh buffer via a direct
    HBM->HBM DMA copy (no padding, no VMEM staging, no layout changes).
    """
    if not use_kernel:
        # Identity elision: strictly faster than any kernel for a passthrough.
        return x

    # Degenerate cases: nothing worth DMAing.
    if x.size == 0 or x.ndim == 0:
        return x

    # Static chunking along the leading axis (contiguous slices, so each DMA
    # is a fully contiguous HBM->HBM transfer).
    lead = int(x.shape[0])
    if x.size * x.dtype.itemsize < _SMALL_BYTES:
        n_chunks = 1
    else:
        n_chunks = min(_MAX_CHUNKS, lead)

    if n_chunks <= 1:
        chunks = None
        n_sems = 1
    else:
        base, rem = divmod(lead, n_chunks)
        chunks = []
        start = 0
        for c in range(n_chunks):
            size = base + (1 if c < rem else 0)
            if size > 0:
                chunks.append((start, size))
                start += size
        chunks = tuple(chunks)
        n_sems = len(chunks)

    return pl.pallas_call(
        functools.partial(_skip_dma_copy_kernel, chunks=chunks),
        out_shape=jax.ShapeDtypeStruct(x.shape, x.dtype),
        in_specs=[pl.BlockSpec(memory_space=pl.ANY)],
        out_specs=pl.BlockSpec(memory_space=pl.ANY),
        scratch_shapes=[pltpu.SemaphoreType.DMA((n_sems,))],
    )(x)


if __name__ == "__main__":
    key = jax.random.PRNGKey(0)
    # Small NCHW input consistent with a conv-style module: batch=2, ch=4, 16x16
    x = jax.random.normal(key, (2, 4, 16, 16), dtype=jnp.float32)

    # Default (optimal) path: identity elision — no kernel launched.
    y_fast = jax.block_until_ready(skip_forward(x))
    assert y_fast.shape == x.shape, f"shape mismatch: {y_fast.shape} vs {x.shape}"
    assert y_fast.dtype == x.dtype, f"dtype mismatch: {y_fast.dtype} vs {x.dtype}"
    assert bool(jnp.all(y_fast == x)), "identity fast-path mismatch"

    # Explicit-copy path: exercises the HBM->HBM DMA Pallas kernel.
    y_kernel = jax.block_until_ready(skip_forward(x, use_kernel=True))
    assert y_kernel.shape == x.shape, f"shape mismatch: {y_kernel.shape} vs {x.shape}"
    assert y_kernel.dtype == x.dtype, f"dtype mismatch: {y_kernel.dtype} vs {x.dtype}"
    assert bool(jnp.all(y_kernel == x)), "identity kernel mismatch"

    # Also exercise the chunked path with a larger (but still modest) input.
    x_big = jax.random.normal(key, (8, 64, 64, 64), dtype=jnp.float32)  # 8 MiB
    y_big = jax.block_until_ready(skip_forward(x_big, use_kernel=True))
    assert bool(jnp.all(y_big == x_big)), "chunked DMA copy mismatch"

    print("KERNEL_OK")
</pallas_src>

<mosaic_0001>
module attributes {stable_mosaic.version = 11 : i64} {
  func.func @_skip_dma_copy_kernel(%arg0: memref<2x4x16x16xf32, #tpu.memory_space<any>>, %arg1: memref<2x4x16x16xf32, #tpu.memory_space<any>>, %arg2: memref<1x!tpu.dma_semaphore, #tpu.memory_space<semaphore_mem>>) attributes {dimension_semantics = [], scalar_prefetch = 0 : i64, scratch_operands = 1 : i64, tpu.core_type = #tpu.core_type<tc>} {
    %c0_i32 = arith.constant 0 : i32
    %0 = tpu.memref_slice %arg2[%c0_i32] : memref<1x!tpu.dma_semaphore, #tpu.memory_space<semaphore_mem>> -> memref<1x!tpu.dma_semaphore, #tpu.memory_space<semaphore_mem>>
    %1 = tpu.memref_squeeze %0 : memref<1x!tpu.dma_semaphore, #tpu.memory_space<semaphore_mem>> -> memref<!tpu.dma_semaphore, #tpu.memory_space<semaphore_mem>>
    tpu.enqueue_dma source(%arg0 : memref<2x4x16x16xf32, #tpu.memory_space<any>>) target(%arg1 : memref<2x4x16x16xf32, #tpu.memory_space<any>>) target_semaphore(%1 : memref<!tpu.dma_semaphore, #tpu.memory_space<semaphore_mem>>)
    %c0_i32_0 = arith.constant 0 : i32
    %2 = tpu.memref_slice %arg2[%c0_i32_0] : memref<1x!tpu.dma_semaphore, #tpu.memory_space<semaphore_mem>> -> memref<1x!tpu.dma_semaphore, #tpu.memory_space<semaphore_mem>>
    %3 = tpu.memref_squeeze %2 : memref<1x!tpu.dma_semaphore, #tpu.memory_space<semaphore_mem>> -> memref<!tpu.dma_semaphore, #tpu.memory_space<semaphore_mem>>
    tpu.wait_dma2 semaphore(%3 : memref<!tpu.dma_semaphore, #tpu.memory_space<semaphore_mem>>) src(%arg0 : memref<2x4x16x16xf32, #tpu.memory_space<any>>) dst(%arg1 : memref<2x4x16x16xf32, #tpu.memory_space<any>>)
    return
  }
}

</mosaic_0001>

<llo_original>
// kernel: tpu_custom_call.1
$region0: #{tpu_custom_call.1}
  #allocation0 [shape = 'u32[]', space=smem, size = 0x4, offset = 0x4, fixed_abs, tag = 'smem constant byte address 0x4 - core index']
  #allocation1 [shape = 'u32[72,128]{1,0:T(1,128)}', space=vmem, size = 0x9000, scoped, tag = 'internal scratch']
  #allocation2 [shape = 's32[1]{0}', space=sflag, size = 0x4, scoped, tag = 'scratch operand']
  #allocation3 [shape = 's32[]', space=sflag, size = 0x4, offset = 0, fixed_abs, tag = 'sflag constant byte address 0x0 - dummy sync flag']
  #allocation4 [shape = 'u32[0]{0}', space=smem, size = 0, offset = 0, fixed_abs, tag = 'smem constant byte address 0x0 - null']
  %s0 = inlined_call_operand.hbm [shape: f32[2,4,16,16], index: 0, kind: input, shape index: {}]
  %s1 = inlined_call_operand.hbm [shape: f32[2,4,16,16], index: 1, kind: output, shape index: {}]
  %s2 = sld [smem:[#allocation0]]
  $region2: #{tpu_custom_call.1} parent=0
    _
  %s4 = ssub.s32 1, %s2
  %s5 = scalar_select 0, %s4, %s2
  %s7 = sshll.u32 1, 14
  %s8 = sxor.u32 4294967295, %s7
  %s10 = sshll.u32 %s0, 4
  %s11 = int_to_ptr.hbm [resolvable:$true] %s10
  %s12 = sshll.u32 %s1, 4
  %s13 = int_to_ptr.hbm [resolvable:$true] %s12
  %16 = dma.general %s11, 2048, %s13, [#allocation2], [#allocation3], [#allocation4], 0, 0
  %s17 = smul.u32 2, 4
  %s18 = smul.u32 %s17, 16
  %s19 = smul.u32 %s18, 1
  %s20 = sshll.u32 %s19, 4
  %21 = dma.done [#allocation2], %s20
  %22 = vsyncmov [#allocation2]
  %s23 = vpop.sfrf %22
  %p24 = scmp.eq.s32.totalorder %s23, 0
  %p25 = pneg %p24
  %27 = shalt.err (%p25)

</llo_original>
